<compile_context>
chip_gen: v7x
topology: tpu7x:2x2x1
jax: 0.10.0
libtpu: 0.0.40
codegen_flags: <defaults>
</compile_context>

<pallas_src>
import functools

import jax
import jax.numpy as jnp
from jax.experimental import pallas as pl
from jax.experimental.pallas import tpu as pltpu

LANE = 128
SUBLANE = 16          # bf16-friendly sublane rounding for the batch axis


def _round_up(x, m):
    return (x + m - 1) // m * m


def bilstm_kernel(x_ref, wg_ref, bg_ref, wc_ref, bc_ref, out_ref, acc_ref, *,
                  h2p):
    """Fused single-step bidirectional LSTM cell + linear classifier.

    Grid = (batch tiles [parallel], D-reduction tiles [arbitrary]).

    x_ref : (bB, bD)      bf16 input tile (TF-IDF features on lanes)
    wg_ref: (bD, 6*h2p)   bf16 fused gate weights [i_f|g_f|o_f|i_b|g_b|o_b]
    bg_ref: (1, 6*h2p)    f32 fused gate biases (b_ih + b_hh, f gate dropped)
    wc_ref: (2*h2p, Cp)   bf16 classifier weight^T (rows: h_fwd pad, h_bwd pad)
    bc_ref: (1, Cp)       f32 classifier bias (lane padded)
    out_ref:(bB, Cp)      f32 logits (lane-dense padded block)
    acc_ref:(bB, 6*h2p)   f32 gate pre-activation accumulator (VMEM scratch)
    """
    k = pl.program_id(1)

    @pl.when(k == 0)
    def _init():
        acc_ref[...] = jnp.zeros_like(acc_ref)

    # Single wide MXU pass for both directions (f32 accumulation).
    acc_ref[...] += jnp.dot(x_ref[...], wg_ref[...],
                            preferred_element_type=jnp.float32)

    @pl.when(k == pl.num_programs(1) - 1)
    def _finish():
        gates = acc_ref[...] + bg_ref[...]
        # 128-aligned lane slices: pure VPU/EUP, no cross-lane relayout.
        i_f = jax.nn.sigmoid(gates[:, 0 * h2p:1 * h2p])
        g_f = jnp.tanh(gates[:, 1 * h2p:2 * h2p])
        o_f = jax.nn.sigmoid(gates[:, 2 * h2p:3 * h2p])
        i_b = jax.nn.sigmoid(gates[:, 3 * h2p:4 * h2p])
        g_b = jnp.tanh(gates[:, 4 * h2p:5 * h2p])
        o_b = jax.nn.sigmoid(gates[:, 5 * h2p:6 * h2p])
        # c = f*c0 + i*g == i*g  (c0 == 0);  h = o * tanh(c)
        h_f = (o_f * jnp.tanh(i_f * g_f)).astype(wc_ref.dtype)
        h_b = (o_b * jnp.tanh(i_b * g_b)).astype(wc_ref.dtype)

        # TODO(synk): nn.Dropout is identity in eval mode; training-time
        # masking is not implemented here.

        # concat(h_f, h_b) @ Wc == h_f @ Wc[:h2p] + h_b @ Wc[h2p:]
        out_ref[...] = (
            jnp.dot(h_f, wc_ref[0:h2p, :], preferred_element_type=jnp.float32)
            + jnp.dot(h_b, wc_ref[h2p:2 * h2p, :],
                      preferred_element_type=jnp.float32)
            + bc_ref[...]
        )


def _tile_d(input_size, gate_w):
    """D-reduction tile: multiple of 128, capped so a double-buffered bf16
    weight tile stays ~<= 2 MiB per buffer (pipelines on all of v5e/v6e/v7x)."""
    padded = _round_up(input_size, LANE)
    cap = max(LANE, (2 * 1024 * 1024 // (gate_w * 2)) // LANE * LANE)
    return min(padded, 1024, cap)


def pack_params(params, input_size, hidden_size, num_classes):
    """Fuse/pad/cast PyTorch-layout f32 params into kernel-layout arrays."""
    h2 = hidden_size // 2
    h2p = _round_up(h2, LANE)                 # per-gate lane-aligned width
    cp = _round_up(num_classes, LANE)         # lane-dense output width
    gate_w = 6 * h2p
    bD = _tile_d(input_size, gate_w)
    padD = _round_up(input_size, bD)

    def gate_cols(w_ih):                      # w_ih: (4*h2, D), rows [i|f|g|o]
        wt = w_ih.T                           # (D, 4*h2)
        cols = []
        for g in (0, 2, 3):                   # keep i, g, o; drop f (f*c0==0)
            blk = jnp.zeros((padD, h2p), jnp.float32)
            blk = blk.at[:input_size, :h2].set(wt[:, g * h2:(g + 1) * h2])
            cols.append(blk)
        return cols

    def gate_bias(b):
        cols = []
        for g in (0, 2, 3):
            blk = jnp.zeros((h2p,), jnp.float32)
            blk = blk.at[:h2].set(b[g * h2:(g + 1) * h2])
            cols.append(blk)
        return cols

    wg = jnp.concatenate(
        gate_cols(params["w_ih_f"]) + gate_cols(params["w_ih_b"]), axis=1
    ).astype(jnp.bfloat16)                                     # (padD, 6*h2p)
    bg = jnp.concatenate(
        gate_bias(params["b_ih_f"] + params["b_hh_f"])
        + gate_bias(params["b_ih_b"] + params["b_hh_b"])
    )[None, :]                                                  # (1, 6*h2p) f32

    wct = params["w_cls"].T                                     # (2*h2, C)
    wc = jnp.zeros((2 * h2p, cp), jnp.float32)
    wc = wc.at[0:h2, :num_classes].set(wct[0:h2])               # h_fwd rows
    wc = wc.at[h2p:h2p + h2, :num_classes].set(wct[h2:2 * h2])  # h_bwd rows
    wc = wc.astype(jnp.bfloat16)

    bc = jnp.zeros((1, cp), jnp.float32).at[0, :num_classes].set(
        params["b_cls"])

    return {"wg": wg, "bg": bg, "wc": wc, "bc": bc,
            "h2p": h2p, "num_classes": num_classes,
            "input_size": input_size, "bD": bD}


def bilstm_forward(x, packed):
    wg, bg, wc, bc = packed["wg"], packed["bg"], packed["wc"], packed["bc"]
    h2p = packed["h2p"]
    num_classes = packed["num_classes"]
    bD = packed["bD"]
    B, D = x.shape
    assert D == packed["input_size"], "input feature dim mismatch vs. packing"
    padD, gate_w = wg.shape
    cp = bc.shape[-1]
    assert padD % bD == 0

    padB = _round_up(max(B, 1), SUBLANE)
    bB = min(512, padB)                       # fewer weight re-streams per batch
    padB = _round_up(padB, bB)

    # Pad + cast input (bf16 activations, f32 accumulation on the MXU).
    x_p = jnp.zeros((padB, padD), jnp.bfloat16).at[:B, :D].set(
        x.astype(jnp.bfloat16))

    nB, nK = padB // bB, padD // bD
    kernel = functools.partial(bilstm_kernel, h2p=h2p)

    flops = 2 * padB * padD * gate_w + 2 * padB * (2 * h2p) * cp
    bytes_accessed = (x_p.size * 2 + nB * wg.size * 2 + wc.size * 2
                      + bg.size * 4 + bc.size * 4 + padB * cp * 4)

    out = pl.pallas_call(
        kernel,
        out_shape=jax.ShapeDtypeStruct((padB, cp), jnp.float32),
        grid_spec=pltpu.PrefetchScalarGridSpec(
            num_scalar_prefetch=0,
            grid=(nB, nK),
            in_specs=[
                pl.BlockSpec((bB, bD), lambda i, k: (i, k)),       # x tile
                pl.BlockSpec((bD, gate_w), lambda i, k: (k, 0)),   # gate W
                pl.BlockSpec((1, gate_w), lambda i, k: (0, 0)),    # gate bias
                pl.BlockSpec((2 * h2p, cp), lambda i, k: (0, 0)),  # classifier W
                pl.BlockSpec((1, cp), lambda i, k: (0, 0)),        # classifier b
            ],
            out_specs=pl.BlockSpec((bB, cp), lambda i, k: (i, 0)),
            scratch_shapes=[pltpu.VMEM((bB, gate_w), jnp.float32)],
        ),
        compiler_params=pltpu.CompilerParams(
            dimension_semantics=("parallel", "arbitrary"),
            vmem_limit_bytes=32 * 1024 * 1024,
        ),
        cost_estimate=pl.CostEstimate(
            flops=int(flops),
            transcendentals=int(padB * 8 * h2p),
            bytes_accessed=int(bytes_accessed),
        ),
    )(x_p, wg, bg, wc, bc)
    return out[:B, :num_classes]


def init_params(key, input_size, hidden_size, num_classes):
    """PyTorch-layout f32 parameters with default uniform init ranges."""
    h2 = hidden_size // 2
    k_lstm = 1.0 / jnp.sqrt(jnp.float32(h2))
    k_lin = 1.0 / jnp.sqrt(jnp.float32(hidden_size))
    keys = jax.random.split(key, 8)

    def unif(k, shape, bound):
        return jax.random.uniform(k, shape, jnp.float32, -bound, bound)

    return {
        # forward direction (weight_ih_l0 etc.); weight_hh multiplies h0 == 0.
        "w_ih_f": unif(keys[0], (4 * h2, input_size), k_lstm),
        "b_ih_f": unif(keys[1], (4 * h2,), k_lstm),
        "b_hh_f": unif(keys[2], (4 * h2,), k_lstm),
        # backward direction (weight_ih_l0_reverse etc.)
        "w_ih_b": unif(keys[3], (4 * h2, input_size), k_lstm),
        "b_ih_b": unif(keys[4], (4 * h2,), k_lstm),
        "b_hh_b": unif(keys[5], (4 * h2,), k_lstm),
        # classifier
        "w_cls": unif(keys[6], (num_classes, hidden_size), k_lin),
        "b_cls": unif(keys[7], (num_classes,), k_lin),
    }


def bilstm_reference(x, params, hidden_size):
    """Pure-JAX f32 reference of the same math (seq_len=1, h0=c0=0)."""
    h2 = hidden_size // 2

    def cell(w_ih, b_ih, b_hh):
        gates = x @ w_ih.T + b_ih + b_hh
        i = jax.nn.sigmoid(gates[:, 0 * h2:1 * h2])
        g = jnp.tanh(gates[:, 2 * h2:3 * h2])
        o = jax.nn.sigmoid(gates[:, 3 * h2:4 * h2])
        return o * jnp.tanh(i * g)          # c = i*g since c0 == 0

    h = jnp.concatenate(
        [cell(params["w_ih_f"], params["b_ih_f"], params["b_hh_f"]),
         cell(params["w_ih_b"], params["b_ih_b"], params["b_hh_b"])], axis=-1)
    return h @ params["w_cls"].T + params["b_cls"]


if __name__ == "__main__":
    batch, input_size, hidden_size, num_classes = 2, 16, 32, 4

    key = jax.random.PRNGKey(0)
    k_x, k_p = jax.random.split(key)
    x = jax.random.normal(k_x, (batch, input_size), jnp.float32)

    params = init_params(k_p, input_size, hidden_size, num_classes)
    packed = pack_params(params, input_size, hidden_size, num_classes)

    logits = bilstm_forward(x, packed)
    jax.block_until_ready(logits)

    ref = bilstm_reference(x, params, hidden_size)
    assert logits.shape == (batch, num_classes)
    # bf16 weight/activation streaming -> looser tolerance vs. the f32 reference.
    assert jnp.allclose(logits, ref, atol=5e-2, rtol=5e-2), \
        float(jnp.max(jnp.abs(logits - ref)))

    print("KERNEL_OK")
</pallas_src>

<mosaic_0001>
module attributes {stable_mosaic.version = 11 : i64} {
  func.func @bilstm_kernel(%arg0: i32, %arg1: i32, %arg2: memref<16x128xbf16, #tpu.memory_space<vmem>>, %arg3: memref<128x768xbf16, #tpu.memory_space<vmem>>, %arg4: memref<1x768xf32, #tpu.memory_space<vmem>>, %arg5: memref<256x128xbf16, #tpu.memory_space<vmem>>, %arg6: memref<1x128xf32, #tpu.memory_space<vmem>>, %arg7: memref<16x128xf32, #tpu.memory_space<vmem>>, %arg8: memref<16x768xf32, #tpu.memory_space<vmem>>) attributes {dimension_semantics = [#tpu.dimension_semantics<parallel>, #tpu.dimension_semantics<arbitrary>], iteration_bounds = array<i64: 1, 1>, scalar_prefetch = 0 : i64, scratch_operands = 1 : i64, tpu.core_type = #tpu.core_type<tc>, window_params = [{transform_indices = @transform_0, window_bounds = array<i64: 16, 128>}, {transform_indices = @transform_1, window_bounds = array<i64: 128, 768>}, {pipeline_mode = #tpu.pipeline_mode<synchronous>, transform_indices = @transform_2, window_bounds = array<i64: 1, 768>}, {pipeline_mode = #tpu.pipeline_mode<synchronous>, transform_indices = @transform_3, window_bounds = array<i64: 256, 128>}, {pipeline_mode = #tpu.pipeline_mode<synchronous>, transform_indices = @transform_4, window_bounds = array<i64: 1, 128>}, {transform_indices = @transform_5, window_bounds = array<i64: 16, 128>}]} {
    %c0_i32 = arith.constant 0 : i32
    %0 = arith.cmpi eq, %arg1, %c0_i32 : i32
    %1 = arith.extui %0 : i1 to i32
    %c0_i32_0 = arith.constant 0 : i32
    %2 = arith.cmpi ne, %1, %c0_i32_0 : i32
    scf.if %2 {
      %cst_10 = arith.constant 0.000000e+00 : f32
      %12 = vector.broadcast %cst_10 : f32 to vector<16x768xf32>
      %c0_11 = arith.constant 0 : index
      %c0_12 = arith.constant 0 : index
      %13 = vector.load %arg8[%c0_11, %c0_12] : memref<16x768xf32, #tpu.memory_space<vmem>>, vector<16x768xf32>
      tpu.vector_store %arg8[%c0_11, %c0_12], %12 {strides = array<i32>} : memref<16x768xf32, #tpu.memory_space<vmem>>, vector<16x768xf32>,
    } else {
    }
    %c0 = arith.constant 0 : index
    %c0_1 = arith.constant 0 : index
    %3 = vector.load %arg8[%c0, %c0_1] : memref<16x768xf32, #tpu.memory_space<vmem>>, vector<16x768xf32>
    %c0_2 = arith.constant 0 : index
    %c0_3 = arith.constant 0 : index
    %4 = vector.load %arg2[%c0_2, %c0_3] : memref<16x128xbf16, #tpu.memory_space<vmem>>, vector<16x128xbf16>
    %c0_4 = arith.constant 0 : index
    %c0_5 = arith.constant 0 : index
    %5 = vector.load %arg3[%c0_4, %c0_5] : memref<128x768xbf16, #tpu.memory_space<vmem>>, vector<128x768xbf16>
    %cst = arith.constant dense<0.000000e+00> : vector<16x768xf32>
    %6 = tpu.matmul %4, %5, %cst {dimension_numbers = #tpu.dot_dimension_numbers<[1], [0], [0], [1], [0, 0, 1, 1], [], []>} : vector<16x128xbf16>, vector<128x768xbf16>, vector<16x768xf32> -> vector<16x768xf32>
    %7 = arith.addf %3, %6 : vector<16x768xf32>
    %c0_6 = arith.constant 0 : index
    %c0_7 = arith.constant 0 : index
    %8 = vector.load %arg8[%c0_6, %c0_7] : memref<16x768xf32, #tpu.memory_space<vmem>>, vector<16x768xf32>
    tpu.vector_store %arg8[%c0_6, %c0_7], %7 {strides = array<i32>} : memref<16x768xf32, #tpu.memory_space<vmem>>, vector<16x768xf32>,
    %c0_i32_8 = arith.constant 0 : i32
    %9 = arith.cmpi eq, %arg1, %c0_i32_8 : i32
    %10 = arith.extui %9 : i1 to i32
    %c0_i32_9 = arith.constant 0 : i32
    %11 = arith.cmpi ne, %10, %c0_i32_9 : i32
    scf.if %11 {
      %c0_10 = arith.constant 0 : index
      %c0_11 = arith.constant 0 : index
      %12 = vector.load %arg8[%c0_10, %c0_11] : memref<16x768xf32, #tpu.memory_space<vmem>>, vector<16x768xf32>
      %c0_12 = arith.constant 0 : index
      %c0_13 = arith.constant 0 : index
      %13 = vector.load %arg4[%c0_12, %c0_13] : memref<1x768xf32, #tpu.memory_space<vmem>>, vector<1x768xf32>
      %14 = vector.broadcast %13 : vector<1x768xf32> to vector<16x768xf32>
      %15 = arith.addf %12, %14 : vector<16x768xf32>
      %16 = vector.extract_strided_slice %15 {offsets = [0, 0], sizes = [16, 128], strides = [1, 1]} : vector<16x768xf32> to vector<16x128xf32>
      %17 = arith.negf %16 : vector<16x128xf32>
      %18 = math.exp %17 : vector<16x128xf32>
      %cst_14 = arith.constant 1.000000e+00 : f32
      %19 = vector.broadcast %cst_14 : f32 to vector<16x128xf32>
      %20 = arith.addf %19, %18 : vector<16x128xf32>
      %21 = arith.divf %19, %20 : vector<16x128xf32>
      %22 = vector.extract_strided_slice %15 {offsets = [0, 128], sizes = [16, 128], strides = [1, 1]} : vector<16x768xf32> to vector<16x128xf32>
      %23 = math.tanh %22 : vector<16x128xf32>
      %24 = vector.extract_strided_slice %15 {offsets = [0, 256], sizes = [16, 128], strides = [1, 1]} : vector<16x768xf32> to vector<16x128xf32>
      %25 = arith.negf %24 : vector<16x128xf32>
      %26 = math.exp %25 : vector<16x128xf32>
      %cst_15 = arith.constant 1.000000e+00 : f32
      %27 = vector.broadcast %cst_15 : f32 to vector<16x128xf32>
      %28 = arith.addf %27, %26 : vector<16x128xf32>
      %29 = arith.divf %27, %28 : vector<16x128xf32>
      %30 = vector.extract_strided_slice %15 {offsets = [0, 384], sizes = [16, 128], strides = [1, 1]} : vector<16x768xf32> to vector<16x128xf32>
      %31 = arith.negf %30 : vector<16x128xf32>
      %32 = math.exp %31 : vector<16x128xf32>
      %cst_16 = arith.constant 1.000000e+00 : f32
      %33 = vector.broadcast %cst_16 : f32 to vector<16x128xf32>
      %34 = arith.addf %33, %32 : vector<16x128xf32>
      %35 = arith.divf %33, %34 : vector<16x128xf32>
      %36 = vector.extract_strided_slice %15 {offsets = [0, 512], sizes = [16, 128], strides = [1, 1]} : vector<16x768xf32> to vector<16x128xf32>
      %37 = math.tanh %36 : vector<16x128xf32>
      %38 = vector.extract_strided_slice %15 {offsets = [0, 640], sizes = [16, 128], strides = [1, 1]} : vector<16x768xf32> to vector<16x128xf32>
      %39 = arith.negf %38 : vector<16x128xf32>
      %40 = math.exp %39 : vector<16x128xf32>
      %cst_17 = arith.constant 1.000000e+00 : f32
      %41 = vector.broadcast %cst_17 : f32 to vector<16x128xf32>
      %42 = arith.addf %41, %40 : vector<16x128xf32>
      %43 = arith.divf %41, %42 : vector<16x128xf32>
      %44 = arith.mulf %21, %23 : vector<16x128xf32>
      %45 = math.tanh %44 : vector<16x128xf32>
      %46 = arith.mulf %29, %45 : vector<16x128xf32>
      %47 = arith.truncf %46 : vector<16x128xf32> to vector<16x128xbf16>
      %48 = arith.mulf %35, %37 : vector<16x128xf32>
      %49 = math.tanh %48 : vector<16x128xf32>
      %50 = arith.mulf %43, %49 : vector<16x128xf32>
      %51 = arith.truncf %50 : vector<16x128xf32> to vector<16x128xbf16>
      %c0_18 = arith.constant 0 : index
      %c0_19 = arith.constant 0 : index
      %52 = vector.load %arg5[%c0_18, %c0_19] : memref<256x128xbf16, #tpu.memory_space<vmem>>, vector<128x128xbf16>
      %cst_20 = arith.constant dense<0.000000e+00> : vector<16x128xf32>
      %53 = tpu.matmul %47, %52, %cst_20 {dimension_numbers = #tpu.dot_dimension_numbers<[1], [0], [0], [1], [0, 0, 1, 1], [], []>} : vector<16x128xbf16>, vector<128x128xbf16>, vector<16x128xf32> -> vector<16x128xf32>
      %c128 = arith.constant 128 : index
      %c0_21 = arith.constant 0 : index
      %54 = vector.load %arg5[%c128, %c0_21] : memref<256x128xbf16, #tpu.memory_space<vmem>>, vector<128x128xbf16>
      %cst_22 = arith.constant dense<0.000000e+00> : vector<16x128xf32>
      %55 = tpu.matmul %51, %54, %cst_22 {dimension_numbers = #tpu.dot_dimension_numbers<[1], [0], [0], [1], [0, 0, 1, 1], [], []>} : vector<16x128xbf16>, vector<128x128xbf16>, vector<16x128xf32> -> vector<16x128xf32>
      %56 = arith.addf %53, %55 : vector<16x128xf32>
      %c0_23 = arith.constant 0 : index
      %c0_24 = arith.constant 0 : index
      %57 = vector.load %arg6[%c0_23, %c0_24] : memref<1x128xf32, #tpu.memory_space<vmem>>, vector<1x128xf32>
      %58 = vector.broadcast %57 : vector<1x128xf32> to vector<16x128xf32>
      %59 = arith.addf %56, %58 : vector<16x128xf32>
      %c0_25 = arith.constant 0 : index
      %c0_26 = arith.constant 0 : index
      %60 = vector.load %arg7[%c0_25, %c0_26] : memref<16x128xf32, #tpu.memory_space<vmem>>, vector<16x128xf32>
      tpu.vector_store %arg7[%c0_25, %c0_26], %59 {strides = array<i32>} : memref<16x128xf32, #tpu.memory_space<vmem>>, vector<16x128xf32>,
    } else {
    }
    return
  }
  func.func @transform_0(%arg0: i32, %arg1: i32) -> (i32, i32) {
    %c0_i32 = arith.constant 0 : i32
    return %arg0, %arg1 : i32, i32
  }
  func.func @transform_1(%arg0: i32, %arg1: i32) -> (i32, i32) {
    %c0_i32 = arith.constant 0 : i32
    %c0_i32_0 = arith.constant 0 : i32
    return %arg1, %c0_i32 : i32, i32
  }
  func.func @transform_2(%arg0: i32, %arg1: i32) -> (i32, i32) {
    %c0_i32 = arith.constant 0 : i32
    %c0_i32_0 = arith.constant 0 : i32
    %c0_i32_1 = arith.constant 0 : i32
    return %c0_i32, %c0_i32_0 : i32, i32
  }
  func.func @transform_3(%arg0: i32, %arg1: i32) -> (i32, i32) {
    %c0_i32 = arith.constant 0 : i32
    %c0_i32_0 = arith.constant 0 : i32
    %c0_i32_1 = arith.constant 0 : i32
    return %c0_i32, %c0_i32_0 : i32, i32
  }
  func.func @transform_4(%arg0: i32, %arg1: i32) -> (i32, i32) {
    %c0_i32 = arith.constant 0 : i32
    %c0_i32_0 = arith.constant 0 : i32
    %c0_i32_1 = arith.constant 0 : i32
    return %c0_i32, %c0_i32_0 : i32, i32
  }
  func.func @transform_5(%arg0: i32, %arg1: i32) -> (i32, i32) {
    %c0_i32 = arith.constant 0 : i32
    %c0_i32_0 = arith.constant 0 : i32
    return %arg0, %c0_i32 : i32, i32
  }
}

</mosaic_0001>

<llo_original>
// kernel: tpu_custom_call.1
$region0: #{tpu_custom_call.1}
  #allocation0 [shape = 'u32[]', space=smem, size = 0x4, offset = 0x4, fixed_abs, tag = 'smem constant byte address 0x4 - core index']
  #allocation1 [shape = 'u32[144,128]{1,0:T(1,128)}', space=vmem, size = 0x12000, scoped, tag = 'internal scratch']
  #allocation2 [shape = 'f32[16,768]{1,0:T(8,128)}', space=vmem, size = 0xc000, scoped, tag = 'scratch operand']
  %s0 = inlined_call_operand.hbm [shape: bf16[16,128], index: 0, kind: input, shape index: {}]
  %s1 = inlined_call_operand.hbm [shape: bf16[128,768], index: 1, kind: input, shape index: {}]
  %s2 = inlined_call_operand.vmem [shape: f32[1,768], index: 2, kind: input, shape index: {}]
  %s3 = inlined_call_operand.hbm [shape: bf16[256,128], index: 3, kind: input, shape index: {}]
  %s4 = inlined_call_operand.vmem [shape: f32[1,128], index: 4, kind: input, shape index: {}]
  %s5 = inlined_call_operand.hbm [shape: f32[16,128], index: 5, kind: output, shape index: {}]
  %s6 = sld [smem:[#allocation0]]
  $region50: #{tpu_custom_call.1} parent=0
    _
  %s8 = ssub.s32 1, %s6
  %s9 = scalar_select 0, %s8, %s6
  $region1: #{tpu_custom_call.1} parent=0
    #allocation3 [shape = 'u8[4096]{0}', space=vmem, size = 0x1000, scoped, tag = 'input window, operand 0, single buffered']
    #allocation4 [shape = 's32[1]{0}', space=sflag, size = 0x4, scoped, tag = 'scoped memory for tpu_custom_call.1']
    #allocation5 [shape = 's32[1]{0}', space=sflag, size = 0x4, scoped, tag = 'scoped memory for tpu_custom_call.1']
    #allocation6 [shape = 'u8[196608]{0}', space=vmem, size = 0x30000, scoped, tag = 'input window, operand 1, single buffered']
    #allocation7 [shape = 's32[1]{0}', space=sflag, size = 0x4, scoped, tag = 'scoped memory for tpu_custom_call.1']
    #allocation8 [shape = 'u8[65536]{0}', space=vmem, size = 0x10000, scoped, tag = 'input window, operand 3, single buffered']
    #allocation9 [shape = 'u8[8192]{0}', space=vmem, size = 0x2000, scoped, tag = 'output window, operand 0, single buffered']
    %10 = vsyncpa [#allocation4], 0
    %11 = vsyncpa [#allocation7], 0
    %12 = vsyncpa [#allocation5], 0
    // Predicated region
    $region2: #{tpu_custom_call.1} parent=1 // pred_check
      _
    $region3: #{tpu_custom_call.1} parent=1 // pred_check_branch
      %14 = sbr.rel (0) target = $region5
    $region4: #{tpu_custom_call.1} parent=1 // pred_region
      %s16 = ssub.s32 128, 128
      %17 = vsyncadd [#allocation4], %s16
      %s18 = sshll.u32 [#allocation3], 4
      %s19 = int_to_ptr.vmem [resolvable:$true] %s18
      %24 = dma.hbm_to_vmem [thread:$0]  %s0, 128, %s19, [#allocation4], 64, 64, 4
    $region5: #{tpu_custom_call.1} parent=1 // pred_fallthru
      _
    // Predicated region
    $region6: #{tpu_custom_call.1} parent=1 // pred_check
      _
    $region7: #{tpu_custom_call.1} parent=1 // pred_check_branch
      %26 = sbr.rel (0) target = $region9
    $region8: #{tpu_custom_call.1} parent=1 // pred_region
      %s28 = ssub.s32 6144, 6144
      %29 = vsyncadd [#allocation7], %s28
      %s30 = sshll.u32 [#allocation6], 4
      %s31 = int_to_ptr.vmem [resolvable:$true] %s30
      %36 = dma.hbm_to_vmem [thread:$0]  %s1, 6144, %s31, [#allocation7], 384, 384, 24
    $region9: #{tpu_custom_call.1} parent=1 // pred_fallthru
      _
    // Predicated region
    $region10: #{tpu_custom_call.1} parent=1 // pred_check
      _
    $region11: #{tpu_custom_call.1} parent=1 // pred_check_branch
      %38 = sbr.rel (0) target = $region13
    $region12: #{tpu_custom_call.1} parent=1 // pred_region
      _
    $region13: #{tpu_custom_call.1} parent=1 // pred_fallthru
      _
    // Predicated region
    $region14: #{tpu_custom_call.1} parent=1 // pred_check
      _
    $region15: #{tpu_custom_call.1} parent=1 // pred_check_branch
      %40 = sbr.rel (0) target = $region17
    $region16: #{tpu_custom_call.1} parent=1 // pred_region
      %s42 = ssub.s32 2048, 2048
      %43 = vsyncadd [#allocation7], %s42
      %s44 = sshll.u32 [#allocation8], 4
      %s45 = int_to_ptr.vmem [resolvable:$true] %s44
      %50 = dma.hbm_to_vmem [thread:$0]  %s3, 2048, %s45, [#allocation7], 64, 64, 4
    $region17: #{tpu_custom_call.1} parent=1 // pred_fallthru
      _
    // Predicated region
    $region18: #{tpu_custom_call.1} parent=1 // pred_check
      _
    $region19: #{tpu_custom_call.1} parent=1 // pred_check_branch
      %52 = sbr.rel (0) target = $region21
    $region20: #{tpu_custom_call.1} parent=1 // pred_region
      _
    $region21: #{tpu_custom_call.1} parent=1 // pred_fallthru
      _
    // Predicated region
    $region22: #{tpu_custom_call.1} parent=1 // pred_check
      _
    $region23: #{tpu_custom_call.1} parent=1 // pred_check_branch
      %54 = sbr.rel (0) target = $region25
    $region24: #{tpu_custom_call.1} parent=1 // pred_region
      %55 = dma.done [#allocation4], 128
    $region25: #{tpu_custom_call.1} parent=1 // pred_fallthru
      _
    // Predicated region
    $region26: #{tpu_custom_call.1} parent=1 // pred_check
      _
    $region27: #{tpu_custom_call.1} parent=1 // pred_check_branch
      %57 = sbr.rel (0) target = $region29
    $region28: #{tpu_custom_call.1} parent=1 // pred_region
      %58 = dma.done [#allocation7], 6144
    $region29: #{tpu_custom_call.1} parent=1 // pred_fallthru
      _
    // Predicated region
    $region30: #{tpu_custom_call.1} parent=1 // pred_check
      _
    $region31: #{tpu_custom_call.1} parent=1 // pred_check_branch
      %60 = sbr.rel (0) target = $region33
    $region32: #{tpu_custom_call.1} parent=1 // pred_region
      %61 = dma.done [#allocation7], 2048
    $region33: #{tpu_custom_call.1} parent=1 // pred_fallthru
      _
    %p63 = scmp.eq.s32.totalorder 0, 0
    // Predicated region
    $region34: #{tpu_custom_call.1} parent=1 // pred_check
      %p64 = pneg %p63
    $region35: #{tpu_custom_call.1} parent=1 // pred_check_branch
      %66 = sbr.rel (%p64) target = $region37
    $region36: #{tpu_custom_call.1} parent=1 // pred_region
      %67 = vst [vmem:[#allocation2] sm:$0xff] 0.0
      %68 = vst [vmem:[#allocation2 + $0x8] sm:$0xff] 0.0
      %69 = vst [vmem:[#allocation2 + $0x10] sm:$0xff] 0.0
      %70 = vst [vmem:[#allocation2 + $0x18] sm:$0xff] 0.0
      %71 = vst [vmem:[#allocation2 + $0x20] sm:$0xff] 0.0
      %72 = vst [vmem:[#allocation2 + $0x28] sm:$0xff] 0.0
      %73 = vst [vmem:[#allocation2 + $0x30] sm:$0xff] 0.0
      %74 = vst [vmem:[#allocation2 + $0x38] sm:$0xff] 0.0
      %75 = vst [vmem:[#allocation2 + $0x40] sm:$0xff] 0.0
      %76 = vst [vmem:[#allocation2 + $0x48] sm:$0xff] 0.0
      %77 = vst [vmem:[#allocation2 + $0x50] sm:$0xff] 0.0
      %78 = vst [vmem:[#allocation2 + $0x58] sm:$0xff] 0.0
    $region37: #{tpu_custom_call.1} parent=1 // pred_fallthru
      _
    %v79 = vld [vmem:[#allocation2] sm:$0xff]
    %v80 = vld [vmem:[#allocation2 + $0x8] sm:$0xff]
    %v81 = vld [vmem:[#allocation2 + $0x10] sm:$0xff]
    %v82 = vld [vmem:[#allocation2 + $0x18] sm:$0xff]
    %v83 = vld [vmem:[#allocation2 + $0x20] sm:$0xff]
    %v84 = vld [vmem:[#allocation2 + $0x28] sm:$0xff]
    %v85 = vld [vmem:[#allocation2 + $0x30] sm:$0xff]
    %v86 = vld [vmem:[#allocation2 + $0x38] sm:$0xff]
    %v87 = vld [vmem:[#allocation2 + $0x40] sm:$0xff]
    %v88 = vld [vmem:[#allocation2 + $0x48] sm:$0xff]
    %v89 = vld [vmem:[#allocation2 + $0x50] sm:$0xff]
    %v90 = vld [vmem:[#allocation2 + $0x58] sm:$0xff]
    %v91 = vld [vmem:[#allocation3] sm:$0xf]
    %v92 = vld [vmem:[#allocation3 + $0x4] sm:$0xf]
    %v93 = vld [vmem:[#allocation6] sm:$0xff]
    %v94 = vld [vmem:[#allocation6 + $0x8] sm:$0xff]
    %v95 = vld [vmem:[#allocation6 + $0x10] sm:$0xff]
    %v96 = vld [vmem:[#allocation6 + $0x18] sm:$0xff]
    %v97 = vld [vmem:[#allocation6 + $0x20] sm:$0xff]
    %v98 = vld [vmem:[#allocation6 + $0x28] sm:$0xff]
    %v99 = vld [vmem:[#allocation6 + $0x30] sm:$0xff]
    %v100 = vld [vmem:[#allocation6 + $0x38] sm:$0xff]
    %v101 = vld [vmem:[#allocation6 + $0x40] sm:$0xff]
    %v102 = vld [vmem:[#allocation6 + $0x48] sm:$0xff]
    %v103 = vld [vmem:[#allocation6 + $0x50] sm:$0xff]
    %v104 = vld [vmem:[#allocation6 + $0x58] sm:$0xff]
    %v105 = vld [vmem:[#allocation6 + $0x60] sm:$0xff]
    %v106 = vld [vmem:[#allocation6 + $0x68] sm:$0xff]
    %v107 = vld [vmem:[#allocation6 + $0x70] sm:$0xff]
    %v108 = vld [vmem:[#allocation6 + $0x78] sm:$0xff]
    %v109 = vld [vmem:[#allocation6 + $0x80] sm:$0xff]
    %v110 = vld [vmem:[#allocation6 + $0x88] sm:$0xff]
    %v111 = vld [vmem:[#allocation6 + $0x90] sm:$0xff]
    %v112 = vld [vmem:[#allocation6 + $0x98] sm:$0xff]
    %v113 = vld [vmem:[#allocation6 + $0xa0] sm:$0xff]
    %v114 = vld [vmem:[#allocation6 + $0xa8] sm:$0xff]
    %v115 = vld [vmem:[#allocation6 + $0xb0] sm:$0xff]
    %v116 = vld [vmem:[#allocation6 + $0xb8] sm:$0xff]
    %v117 = vld [vmem:[#allocation6 + $0xc0] sm:$0xff]
    %v118 = vld [vmem:[#allocation6 + $0xc8] sm:$0xff]
    %v119 = vld [vmem:[#allocation6 + $0xd0] sm:$0xff]
    %v120 = vld [vmem:[#allocation6 + $0xd8] sm:$0xff]
    %v121 = vld [vmem:[#allocation6 + $0xe0] sm:$0xff]
    %v122 = vld [vmem:[#allocation6 + $0xe8] sm:$0xff]
    %v123 = vld [vmem:[#allocation6 + $0xf0] sm:$0xff]
    %v124 = vld [vmem:[#allocation6 + $0xf8] sm:$0xff]
    %v125 = vld [vmem:[#allocation6 + $0x100] sm:$0xff]
    %v126 = vld [vmem:[#allocation6 + $0x108] sm:$0xff]
    %v127 = vld [vmem:[#allocation6 + $0x110] sm:$0xff]
    %v128 = vld [vmem:[#allocation6 + $0x118] sm:$0xff]
    %v129 = vld [vmem:[#allocation6 + $0x120] sm:$0xff]
    %v130 = vld [vmem:[#allocation6 + $0x128] sm:$0xff]
    %v131 = vld [vmem:[#allocation6 + $0x130] sm:$0xff]
    %v132 = vld [vmem:[#allocation6 + $0x138] sm:$0xff]
    %v133 = vld [vmem:[#allocation6 + $0x140] sm:$0xff]
    %v134 = vld [vmem:[#allocation6 + $0x148] sm:$0xff]
    %v135 = vld [vmem:[#allocation6 + $0x150] sm:$0xff]
    %v136 = vld [vmem:[#allocation6 + $0x158] sm:$0xff]
    %v137 = vld [vmem:[#allocation6 + $0x160] sm:$0xff]
    %v138 = vld [vmem:[#allocation6 + $0x168] sm:$0xff]
    %v139 = vld [vmem:[#allocation6 + $0x170] sm:$0xff]
    %v140 = vld [vmem:[#allocation6 + $0x178] sm:$0xff]
    %v143 = vunpack.c.l.b16 %v91
    %v144 = vunpack.c.l.b16 %v92
    %v145 = vpack.c.b16 %v144, %v143
    %v195 = vunpack.c.l.b16 %v93
    %v196 = vunpack.c.h.b16 %v93
    %v197 = vunpack.c.l.b16 %v94
    %v198 = vunpack.c.h.b16 %v94
    %v199 = vunpack.c.l.b16 %v95
    %v200 = vunpack.c.h.b16 %v95
    %v201 = vunpack.c.l.b16 %v96
    %v202 = vunpack.c.h.b16 %v96
    %v203 = vunpack.c.l.b16 %v97
    %v204 = vunpack.c.h.b16 %v97
    %v205 = vunpack.c.l.b16 %v98
    %v206 = vunpack.c.h.b16 %v98
    %v207 = vunpack.c.l.b16 %v99
    %v208 = vunpack.c.h.b16 %v99
    %v209 = vunpack.c.l.b16 %v100
    %v210 = vunpack.c.h.b16 %v100
    %v211 = vunpack.c.l.b16 %v101
    %v212 = vunpack.c.h.b16 %v101
    %v213 = vunpack.c.l.b16 %v102
    %v214 = vunpack.c.h.b16 %v102
    %v215 = vunpack.c.l.b16 %v103
    %v216 = vunpack.c.h.b16 %v103
    %v217 = vunpack.c.l.b16 %v104
    %v218 = vunpack.c.h.b16 %v104
    %v219 = vunpack.c.l.b16 %v105
    %v220 = vunpack.c.h.b16 %v105
    %v221 = vunpack.c.l.b16 %v106
    %v222 = vunpack.c.h.b16 %v106
    %v223 = vunpack.c.l.b16 %v107
    %v224 = vunpack.c.h.b16 %v107
    %v225 = vunpack.c.l.b16 %v108
    %v226 = vunpack.c.h.b16 %v108
    %v227 = vunpack.c.l.b16 %v109
    %v228 = vunpack.c.h.b16 %v109
    %v229 = vunpack.c.l.b16 %v110
    %v230 = vunpack.c.h.b16 %v110
    %v231 = vunpack.c.l.b16 %v111
    %v232 = vunpack.c.h.b16 %v111
    %v233 = vunpack.c.l.b16 %v112
    %v234 = vunpack.c.h.b16 %v112
    %v235 = vunpack.c.l.b16 %v113
    %v236 = vunpack.c.h.b16 %v113
    %v237 = vunpack.c.l.b16 %v114
    %v238 = vunpack.c.h.b16 %v114
    %v239 = vunpack.c.l.b16 %v115
    %v240 = vunpack.c.h.b16 %v115
    %v241 = vunpack.c.l.b16 %v116
    %v242 = vunpack.c.h.b16 %v116
    %v243 = vunpack.c.l.b16 %v117
    %v244 = vunpack.c.h.b16 %v117
    %v245 = vunpack.c.l.b16 %v118
    %v246 = vunpack.c.h.b16 %v118
    %v247 = vunpack.c.l.b16 %v119
    %v248 = vunpack.c.h.b16 %v119
    %v249 = vunpack.c.l.b16 %v120
    %v250 = vunpack.c.h.b16 %v120
    %v251 = vunpack.c.l.b16 %v121
    %v252 = vunpack.c.h.b16 %v121
    %v253 = vunpack.c.l.b16 %v122
    %v254 = vunpack.c.h.b16 %v122
    %v255 = vunpack.c.l.b16 %v123
    %v256 = vunpack.c.h.b16 %v123
    %v257 = vunpack.c.l.b16 %v124
    %v258 = vunpack.c.h.b16 %v124
    %v259 = vunpack.c.l.b16 %v125
    %v260 = vunpack.c.h.b16 %v125
    %v261 = vunpack.c.l.b16 %v126
    %v262 = vunpack.c.h.b16 %v126
    %v263 = vunpack.c.l.b16 %v127
    %v264 = vunpack.c.h.b16 %v127
    %v265 = vunpack.c.l.b16 %v128
    %v266 = vunpack.c.h.b16 %v128
    %v267 = vunpack.c.l.b16 %v129
    %v268 = vunpack.c.h.b16 %v129
    %v269 = vunpack.c.l.b16 %v130
    %v270 = vunpack.c.h.b16 %v130
    %v271 = vunpack.c.l.b16 %v131
    %v272 = vunpack.c.h.b16 %v131
    %v273 = vunpack.c.l.b16 %v132
    %v274 = vunpack.c.h.b16 %v132
    %v275 = vunpack.c.l.b16 %v133
    %v276 = vunpack.c.h.b16 %v133
    %v277 = vunpack.c.l.b16 %v134
    %v278 = vunpack.c.h.b16 %v134
    %v279 = vunpack.c.l.b16 %v135
    %v280 = vunpack.c.h.b16 %v135
    %v281 = vunpack.c.l.b16 %v136
    %v282 = vunpack.c.h.b16 %v136
    %v283 = vunpack.c.l.b16 %v137
    %v284 = vunpack.c.h.b16 %v137
    %v285 = vunpack.c.l.b16 %v138
    %v286 = vunpack.c.h.b16 %v138
    %v287 = vunpack.c.l.b16 %v139
    %v288 = vunpack.c.h.b16 %v139
    %v289 = vunpack.c.l.b16 %v140
    %v290 = vunpack.c.h.b16 %v140
    %v291 = vpack.c.b16 %v201, %v195
    %v292 = vpack.c.b16 %v202, %v196
    %v293 = vpack.c.b16 %v203, %v197
    %v294 = vpack.c.b16 %v204, %v198
    %v295 = vpack.c.b16 %v205, %v199
    %v296 = vpack.c.b16 %v206, %v200
    %v297 = vpack.c.b16 %v213, %v207
    %v298 = vpack.c.b16 %v214, %v208
    %v299 = vpack.c.b16 %v215, %v209
    %v300 = vpack.c.b16 %v216, %v210
    %v301 = vpack.c.b16 %v217, %v211
    %v302 = vpack.c.b16 %v218, %v212
    %v303 = vpack.c.b16 %v225, %v219
    %v304 = vpack.c.b16 %v226, %v220
    %v305 = vpack.c.b16 %v227, %v221
    %v306 = vpack.c.b16 %v228, %v222
    %v307 = vpack.c.b16 %v229, %v223
    %v308 = vpack.c.b16 %v230, %v224
    %v309 = vpack.c.b16 %v237, %v231
    %v310 = vpack.c.b16 %v238, %v232
    %v311 = vpack.c.b16 %v239, %v233
    %v312 = vpack.c.b16 %v240, %v234
    %v313 = vpack.c.b16 %v241, %v235
    %v314 = vpack.c.b16 %v242, %v236
    %v315 = vpack.c.b16 %v249, %v243
    %v316 = vpack.c.b16 %v250, %v244
    %v317 = vpack.c.b16 %v251, %v245
    %v318 = vpack.c.b16 %v252, %v246
    %v319 = vpack.c.b16 %v253, %v247
    %v320 = vpack.c.b16 %v254, %v248
    %v321 = vpack.c.b16 %v261, %v255
    %v322 = vpack.c.b16 %v262, %v256
    %v323 = vpack.c.b16 %v263, %v257
    %v324 = vpack.c.b16 %v264, %v258
    %v325 = vpack.c.b16 %v265, %v259
    %v326 = vpack.c.b16 %v266, %v260
    %v327 = vpack.c.b16 %v273, %v267
    %v328 = vpack.c.b16 %v274, %v268
    %v329 = vpack.c.b16 %v275, %v269
    %v330 = vpack.c.b16 %v276, %v270
    %v331 = vpack.c.b16 %v277, %v271
    %v332 = vpack.c.b16 %v278, %v272
    %v333 = vpack.c.b16 %v285, %v279
    %v334 = vpack.c.b16 %v286, %v280
    %v335 = vpack.c.b16 %v287, %v281
    %v336 = vpack.c.b16 %v288, %v282
    %v337 = vpack.c.b16 %v289, %v283
    %v338 = vpack.c.b16 %v290, %v284
    %387 = vmatprep.subr.bf16.mxu0 %v292
    %388 = vmatpush1.bf16.msra.mxu0 %v291
    %389 = vmatprep.subr.bf16.mxu0 %v298
    %390 = vmatpush1.bf16.msra.mxu0 %v297
    %391 = vmatprep.subr.bf16.mxu0 %v304
    %392 = vmatpush1.bf16.msra.mxu0 %v303
    %393 = vmatprep.subr.bf16.mxu0 %v310
    %394 = vmatpush1.bf16.msra.mxu0 %v309
    %395 = vmatprep.subr.bf16.mxu0 %v316
    %396 = vmatpush1.bf16.msra.mxu0 %v315
    %397 = vmatprep.subr.bf16.mxu0 %v322
    %398 = vmatpush1.bf16.msra.mxu0 %v321
    %399 = vmatprep.subr.bf16.mxu0 %v328
    %400 = vmatpush1.bf16.msra.mxu0 %v327
    %401 = vmatprep.subr.bf16.mxu0 %v334
    %402 = vmatpush1.bf16.msra.mxu0 %v333
    %403 = vmatprep.subr.bf16.mxu0 0
    %404 = vmatpush1.bf16.msra.mxu0 0
    %405 = vmatprep.subr.bf16.mxu0 0
    %406 = vmatpush1.bf16.msra.mxu0 0
    %407 = vmatprep.subr.bf16.mxu0 0
    %408 = vmatpush1.bf16.msra.mxu0 0
    %409 = vmatprep.subr.bf16.mxu0 0
    %410 = vmatpush1.bf16.msra.mxu0 0
    %411 = vmatprep.subr.bf16.mxu0 0
    %412 = vmatpush1.bf16.msra.mxu0 0
    %413 = vmatprep.subr.bf16.mxu0 0
    %414 = vmatpush1.bf16.msra.mxu0 0
    %415 = vmatprep.subr.bf16.mxu0 0
    %416 = vmatpush1.bf16.msra.mxu0 0
    %417 = vmatprep.subr.bf16.mxu0 0
    %418 = vmatpush1.bf16.msra.mxu0 0
    %419 = vmatprep.mubr.bf16.mxu0 0
    %420 = vmatmul.mubr.bf16.gmra.mrb[0].mxu0 %v145
    %v421 = vpop.f32.mrb[0].mxu0
    %v422 = vadd.f32 0.0, %v421
    %v423 = vpop.f32.mrb[0].mxu0
    %v424 = vadd.f32 0.0, %v423
    %v425 = vpop.f32.mrb[0].mxu0
    %v426 = vadd.f32 0.0, %v425
    %v427 = vpop.f32.mrb[0].mxu0
    %v428 = vadd.f32 0.0, %v427
    %429 = vdwg.mxu0
    %430 = vmatprep.subr.bf16.mxu0 %v294
    %431 = vmatpush1.bf16.msra.mxu0 %v293
    %432 = vmatprep.subr.bf16.mxu0 %v300
    %433 = vmatpush1.bf16.msra.mxu0 %v299
    %434 = vmatprep.subr.bf16.mxu0 %v306
    %435 = vmatpush1.bf16.msra.mxu0 %v305
    %436 = vmatprep.subr.bf16.mxu0 %v312
    %437 = vmatpush1.bf16.msra.mxu0 %v311
    %438 = vmatprep.subr.bf16.mxu0 %v318
    %439 = vmatpush1.bf16.msra.mxu0 %v317
    %440 = vmatprep.subr.bf16.mxu0 %v324
    %441 = vmatpush1.bf16.msra.mxu0 %v323
    %442 = vmatprep.subr.bf16.mxu0 %v330
    %443 = vmatpush1.bf16.msra.mxu0 %v329
    %444 = vmatprep.subr.bf16.mxu0 %v336
    %445 = vmatpush1.bf16.msra.mxu0 %v335
    %446 = vmatprep.subr.bf16.mxu0 0
    %447 = vmatpush1.bf16.msra.mxu0 0
    %448 = vmatprep.subr.bf16.mxu0 0
    %449 = vmatpush1.bf16.msra.mxu0 0
    %450 = vmatprep.subr.bf16.mxu0 0
    %451 = vmatpush1.bf16.msra.mxu0 0
    %452 = vmatprep.subr.bf16.mxu0 0
    %453 = vmatpush1.bf16.msra.mxu0 0
    %454 = vmatprep.subr.bf16.mxu0 0
    %455 = vmatpush1.bf16.msra.mxu0 0
    %456 = vmatprep.subr.bf16.mxu0 0
    %457 = vmatpush1.bf16.msra.mxu0 0
    %458 = vmatprep.subr.bf16.mxu0 0
    %459 = vmatpush1.bf16.msra.mxu0 0
    %460 = vmatprep.subr.bf16.mxu0 0
    %461 = vmatpush1.bf16.msra.mxu0 0
    %462 = vmatprep.mubr.bf16.mxu0 0
    %463 = vmatmul.mubr.bf16.gmra.mrb[0].mxu0 %v145
    %v464 = vpop.f32.mrb[0].mxu0
    %v465 = vadd.f32 0.0, %v464
    %v466 = vpop.f32.mrb[0].mxu0
    %v467 = vadd.f32 0.0, %v466
    %v468 = vpop.f32.mrb[0].mxu0
    %v469 = vadd.f32 0.0, %v468
    %v470 = vpop.f32.mrb[0].mxu0
    %v471 = vadd.f32 0.0, %v470
    %472 = vdwg.mxu0
    %473 = vmatprep.subr.bf16.mxu0 %v296
    %474 = vmatpush1.bf16.msra.mxu0 %v295
    %475 = vmatprep.subr.bf16.mxu0 %v302
    %476 = vmatpush1.bf16.msra.mxu0 %v301
    %477 = vmatprep.subr.bf16.mxu0 %v308
    %478 = vmatpush1.bf16.msra.mxu0 %v307
    %479 = vmatprep.subr.bf16.mxu0 %v314
    %480 = vmatpush1.bf16.msra.mxu0 %v313
    %481 = vmatprep.subr.bf16.mxu0 %v320
    %482 = vmatpush1.bf16.msra.mxu0 %v319
    %483 = vmatprep.subr.bf16.mxu0 %v326
    %484 = vmatpush1.bf16.msra.mxu0 %v325
    %485 = vmatprep.subr.bf16.mxu0 %v332
    %486 = vmatpush1.bf16.msra.mxu0 %v331
    %487 = vmatprep.subr.bf16.mxu0 %v338
    %488 = vmatpush1.bf16.msra.mxu0 %v337
    %489 = vmatprep.subr.bf16.mxu0 0
    %490 = vmatpush1.bf16.msra.mxu0 0
    %491 = vmatprep.subr.bf16.mxu0 0
    %492 = vmatpush1.bf16.msra.mxu0 0
    %493 = vmatprep.subr.bf16.mxu0 0
    %494 = vmatpush1.bf16.msra.mxu0 0
    %495 = vmatprep.subr.bf16.mxu0 0
    %496 = vmatpush1.bf16.msra.mxu0 0
    %497 = vmatprep.subr.bf16.mxu0 0
    %498 = vmatpush1.bf16.msra.mxu0 0
    %499 = vmatprep.subr.bf16.mxu0 0
    %500 = vmatpush1.bf16.msra.mxu0 0
    %501 = vmatprep.subr.bf16.mxu0 0
    %502 = vmatpush1.bf16.msra.mxu0 0
    %503 = vmatprep.subr.bf16.mxu0 0
    %504 = vmatpush1.bf16.msra.mxu0 0
    %505 = vmatprep.mubr.bf16.mxu0 0
    %506 = vmatmul.mubr.bf16.gmra.mrb[0].mxu0 %v145
    %v507 = vpop.f32.mrb[0].mxu0
    %v508 = vadd.f32 0.0, %v507
    %v509 = vpop.f32.mrb[0].mxu0
    %v510 = vadd.f32 0.0, %v509
    %v511 = vpop.f32.mrb[0].mxu0
    %v512 = vadd.f32 0.0, %v511
    %v513 = vpop.f32.mrb[0].mxu0
    %v514 = vadd.f32 0.0, %v513
    %515 = vdwg.mxu0
    %v516 = vadd.f32 %v79, %v422
    %v517 = vadd.f32 %v80, %v424
    %v518 = vadd.f32 %v81, %v465
    %v519 = vadd.f32 %v82, %v467
    %v520 = vadd.f32 %v83, %v508
    %v521 = vadd.f32 %v84, %v510
    %v522 = vadd.f32 %v85, %v426
    %v523 = vadd.f32 %v86, %v428
    %v524 = vadd.f32 %v87, %v469
    %v525 = vadd.f32 %v88, %v471
    %v526 = vadd.f32 %v89, %v512
    %v527 = vadd.f32 %v90, %v514
    %528 = vst [vmem:[#allocation2] sm:$0xff] %v516
    %529 = vst [vmem:[#allocation2 + $0x8] sm:$0xff] %v517
    %530 = vst [vmem:[#allocation2 + $0x10] sm:$0xff] %v518
    %531 = vst [vmem:[#allocation2 + $0x18] sm:$0xff] %v519
    %532 = vst [vmem:[#allocation2 + $0x20] sm:$0xff] %v520
    %533 = vst [vmem:[#allocation2 + $0x28] sm:$0xff] %v521
    %534 = vst [vmem:[#allocation2 + $0x30] sm:$0xff] %v522
    %535 = vst [vmem:[#allocation2 + $0x38] sm:$0xff] %v523
    %536 = vst [vmem:[#allocation2 + $0x40] sm:$0xff] %v524
    %537 = vst [vmem:[#allocation2 + $0x48] sm:$0xff] %v525
    %538 = vst [vmem:[#allocation2 + $0x50] sm:$0xff] %v526
    %539 = vst [vmem:[#allocation2 + $0x58] sm:$0xff] %v527
    // Predicated region
    $region38: #{tpu_custom_call.1} parent=1 // pred_check
      %p540 = pneg %p63
    $region39: #{tpu_custom_call.1} parent=1 // pred_check_branch
      %542 = sbr.rel (%p540) target = $region41
    $region40: #{tpu_custom_call.1} parent=1 // pred_region
      %v543 = vld [vmem:[#allocation2] sm:$0xff]
      %v544 = vld [vmem:[#allocation2 + $0x8] sm:$0xff]
      %v545 = vld [vmem:[#allocation2 + $0x10] sm:$0xff]
      %v546 = vld [vmem:[#allocation2 + $0x18] sm:$0xff]
      %v547 = vld [vmem:[#allocation2 + $0x20] sm:$0xff]
      %v548 = vld [vmem:[#allocation2 + $0x28] sm:$0xff]
      %v549 = vld [vmem:[#allocation2 + $0x30] sm:$0xff]
      %v550 = vld [vmem:[#allocation2 + $0x38] sm:$0xff]
      %v551 = vld [vmem:[#allocation2 + $0x40] sm:$0xff]
      %v552 = vld [vmem:[#allocation2 + $0x48] sm:$0xff]
      %v553 = vld [vmem:[#allocation2 + $0x50] sm:$0xff]
      %v554 = vld [vmem:[#allocation2 + $0x58] sm:$0xff]
      %v555 = vld [vmem:[%s2] sm:$0x3f]
      %v557 = vlaneseq
      %v558 = vshrl.u32 %v557, 7
      %v559 = vsub.s32 0, %v558
      %v560 = vrot.slane %v555, %v559
      %v561 = vlaneseq
      %v562 = vshrl.u32 %v561, 7
      %v563 = vsub.s32 1, %v562
      %v564 = vrot.slane %v555, %v563
      %v565 = vlaneseq
      %v566 = vshrl.u32 %v565, 7
      %v567 = vsub.s32 2, %v566
      %v568 = vrot.slane %v555, %v567
      %v569 = vlaneseq
      %v570 = vshrl.u32 %v569, 7
      %v571 = vsub.s32 3, %v570
      %v572 = vrot.slane %v555, %v571
      %v573 = vlaneseq
      %v574 = vshrl.u32 %v573, 7
      %v575 = vsub.s32 4, %v574
      %v576 = vrot.slane %v555, %v575
      %v577 = vlaneseq
      %v578 = vshrl.u32 %v577, 7
      %v579 = vsub.s32 5, %v578
      %v580 = vrot.slane %v555, %v579
      %v587 = vadd.f32 %v543, %v560
      %v588 = vadd.f32 %v544, %v564
      %v589 = vadd.f32 %v545, %v568
      %v590 = vadd.f32 %v546, %v572
      %v591 = vadd.f32 %v547, %v576
      %v592 = vadd.f32 %v548, %v580
      %v593 = vadd.f32 %v549, %v560
      %v594 = vadd.f32 %v550, %v564
      %v595 = vadd.f32 %v551, %v568
      %v596 = vadd.f32 %v552, %v572
      %v597 = vadd.f32 %v553, %v576
      %v598 = vadd.f32 %v554, %v580
      %v599 = vxor.u32 %v587, 2147483648
      %v600 = vxor.u32 %v593, 2147483648
      %v601 = vmul.f32 %v599, 1.442695
      %v602 = vpow.pop %v601
      %v603 = vmul.f32 %v600, 1.442695
      %v604 = vpow.pop %v603
      %v605 = vadd.f32 %v602, 1.0
      %v606 = vadd.f32 %v604, 1.0
      %v607 = vrcp.pop %v605
      %v608 = vmul.f32 1.0, %v607
      %v609 = vrcp.pop %v606
      %v610 = vmul.f32 1.0, %v609
      %v611 = vtanh.pop %v588
      %v612 = vtanh.pop %v594
      %v613 = vxor.u32 %v589, 2147483648
      %v614 = vxor.u32 %v595, 2147483648
      %v615 = vmul.f32 %v613, 1.442695
      %v616 = vpow.pop %v615
      %v617 = vmul.f32 %v614, 1.442695
      %v618 = vpow.pop %v617
      %v619 = vadd.f32 %v616, 1.0
      %v620 = vadd.f32 %v618, 1.0
      %v621 = vrcp.pop %v619
      %v622 = vmul.f32 1.0, %v621
      %v623 = vrcp.pop %v620
      %v624 = vmul.f32 1.0, %v623
      %v625 = vxor.u32 %v590, 2147483648
      %v626 = vxor.u32 %v596, 2147483648
      %v627 = vmul.f32 %v625, 1.442695
      %v628 = vpow.pop %v627
      %v629 = vmul.f32 %v626, 1.442695
      %v630 = vpow.pop %v629
      %v631 = vadd.f32 %v628, 1.0
      %v632 = vadd.f32 %v630, 1.0
      %v633 = vrcp.pop %v631
      %v634 = vmul.f32 1.0, %v633
      %v635 = vrcp.pop %v632
      %v636 = vmul.f32 1.0, %v635
      %v637 = vtanh.pop %v591
      %v638 = vtanh.pop %v597
      %v639 = vxor.u32 %v592, 2147483648
      %v640 = vxor.u32 %v598, 2147483648
      %v641 = vmul.f32 %v639, 1.442695
      %v642 = vpow.pop %v641
      %v643 = vmul.f32 %v640, 1.442695
      %v644 = vpow.pop %v643
      %v645 = vadd.f32 %v642, 1.0
      %v646 = vadd.f32 %v644, 1.0
      %v647 = vrcp.pop %v645
      %v648 = vmul.f32 1.0, %v647
      %v649 = vrcp.pop %v646
      %v650 = vmul.f32 1.0, %v649
      %v651 = vmul.f32 %v608, %v611
      %v652 = vmul.f32 %v610, %v612
      %v653 = vtanh.pop %v651
      %v654 = vtanh.pop %v652
      %v655 = vmul.f32 %v622, %v653
      %v656 = vmul.f32 %v624, %v654
      %v657 = vpack.c.bf16 %v656, %v655
      %v658 = vmul.f32 %v634, %v637
      %v659 = vmul.f32 %v636, %v638
      %v660 = vtanh.pop %v658
      %v661 = vtanh.pop %v659
      %v662 = vmul.f32 %v648, %v660
      %v663 = vmul.f32 %v650, %v661
      %v664 = vpack.c.bf16 %v663, %v662
      %v665 = vld [vmem:[#allocation8] sm:$0xf]
      %v666 = vld [vmem:[#allocation8 + $0x4] sm:$0xf]
      %v667 = vld [vmem:[#allocation8 + $0x8] sm:$0xf]
      %v668 = vld [vmem:[#allocation8 + $0xc] sm:$0xf]
      %v669 = vld [vmem:[#allocation8 + $0x10] sm:$0xf]
      %v670 = vld [vmem:[#allocation8 + $0x14] sm:$0xf]
      %v671 = vld [vmem:[#allocation8 + $0x18] sm:$0xf]
      %v672 = vld [vmem:[#allocation8 + $0x1c] sm:$0xf]
      %v673 = vld [vmem:[#allocation8 + $0x20] sm:$0xf]
      %v674 = vld [vmem:[#allocation8 + $0x24] sm:$0xf]
      %v675 = vld [vmem:[#allocation8 + $0x28] sm:$0xf]
      %v676 = vld [vmem:[#allocation8 + $0x2c] sm:$0xf]
      %v677 = vld [vmem:[#allocation8 + $0x30] sm:$0xf]
      %v678 = vld [vmem:[#allocation8 + $0x34] sm:$0xf]
      %v679 = vld [vmem:[#allocation8 + $0x38] sm:$0xf]
      %v680 = vld [vmem:[#allocation8 + $0x3c] sm:$0xf]
      %v681 = vld [vmem:[#allocation8 + $0x40] sm:$0xf]
      %v682 = vld [vmem:[#allocation8 + $0x44] sm:$0xf]
      %v683 = vld [vmem:[#allocation8 + $0x48] sm:$0xf]
      %v684 = vld [vmem:[#allocation8 + $0x4c] sm:$0xf]
      %v685 = vld [vmem:[#allocation8 + $0x50] sm:$0xf]
      %v686 = vld [vmem:[#allocation8 + $0x54] sm:$0xf]
      %v687 = vld [vmem:[#allocation8 + $0x58] sm:$0xf]
      %v688 = vld [vmem:[#allocation8 + $0x5c] sm:$0xf]
      %v689 = vld [vmem:[#allocation8 + $0x60] sm:$0xf]
      %v690 = vld [vmem:[#allocation8 + $0x64] sm:$0xf]
      %v691 = vld [vmem:[#allocation8 + $0x68] sm:$0xf]
      %v692 = vld [vmem:[#allocation8 + $0x6c] sm:$0xf]
      %v693 = vld [vmem:[#allocation8 + $0x70] sm:$0xf]
      %v694 = vld [vmem:[#allocation8 + $0x74] sm:$0xf]
      %v695 = vld [vmem:[#allocation8 + $0x78] sm:$0xf]
      %v696 = vld [vmem:[#allocation8 + $0x7c] sm:$0xf]
      %v713 = vunpack.c.l.b16 %v681
      %v714 = vunpack.c.l.b16 %v682
      %v715 = vunpack.c.l.b16 %v683
      %v716 = vunpack.c.l.b16 %v684
      %v717 = vunpack.c.l.b16 %v685
      %v718 = vunpack.c.l.b16 %v686
      %v719 = vunpack.c.l.b16 %v687
      %v720 = vunpack.c.l.b16 %v688
      %v721 = vunpack.c.l.b16 %v689
      %v722 = vunpack.c.l.b16 %v690
      %v723 = vunpack.c.l.b16 %v691
      %v724 = vunpack.c.l.b16 %v692
      %v725 = vunpack.c.l.b16 %v693
      %v726 = vunpack.c.l.b16 %v694
      %v727 = vunpack.c.l.b16 %v695
      %v728 = vunpack.c.l.b16 %v696
      %v729 = vpack.c.b16 %v714, %v713
      %v730 = vpack.c.b16 %v716, %v715
      %v731 = vpack.c.b16 %v718, %v717
      %v732 = vpack.c.b16 %v720, %v719
      %v733 = vpack.c.b16 %v722, %v721
      %v734 = vpack.c.b16 %v724, %v723
      %v735 = vpack.c.b16 %v726, %v725
      %v736 = vpack.c.b16 %v728, %v727
      %745 = vmatprep.subr.bf16.mxu0 0
      %746 = vmatpush1.bf16.msra.mxu0 %v729
      %747 = vmatprep.subr.bf16.mxu0 0
      %748 = vmatpush1.bf16.msra.mxu0 %v730
      %749 = vmatprep.subr.bf16.mxu0 0
      %750 = vmatpush1.bf16.msra.mxu0 %v731
      %751 = vmatprep.subr.bf16.mxu0 0
      %752 = vmatpush1.bf16.msra.mxu0 %v732
      %753 = vmatprep.subr.bf16.mxu0 0
      %754 = vmatpush1.bf16.msra.mxu0 %v733
      %755 = vmatprep.subr.bf16.mxu0 0
      %756 = vmatpush1.bf16.msra.mxu0 %v734
      %757 = vmatprep.subr.bf16.mxu0 0
      %758 = vmatpush1.bf16.msra.mxu0 %v735
      %759 = vmatprep.subr.bf16.mxu0 0
      %760 = vmatpush1.bf16.msra.mxu0 %v736
      %761 = vmatprep.subr.bf16.mxu0 0
      %762 = vmatpush1.bf16.msra.mxu0 0
      %763 = vmatprep.subr.bf16.mxu0 0
      %764 = vmatpush1.bf16.msra.mxu0 0
      %765 = vmatprep.subr.bf16.mxu0 0
      %766 = vmatpush1.bf16.msra.mxu0 0
      %767 = vmatprep.subr.bf16.mxu0 0
      %768 = vmatpush1.bf16.msra.mxu0 0
      %769 = vmatprep.subr.bf16.mxu0 0
      %770 = vmatpush1.bf16.msra.mxu0 0
      %771 = vmatprep.subr.bf16.mxu0 0
      %772 = vmatpush1.bf16.msra.mxu0 0
      %773 = vmatprep.subr.bf16.mxu0 0
      %774 = vmatpush1.bf16.msra.mxu0 0
      %775 = vmatprep.subr.bf16.mxu0 0
      %776 = vmatpush1.bf16.msra.mxu0 0
      %777 = vmatprep.mubr.bf16.mxu0 0
      %778 = vmatmul.mubr.bf16.gmra.mrb[0].mxu0 %v664
      %v779 = vpop.f32.mrb[0].mxu0
      %v780 = vadd.f32 0.0, %v779
      %v781 = vpop.f32.mrb[0].mxu0
      %v782 = vpop.f32.mrb[0].mxu0
      %v783 = vadd.f32 0.0, %v782
      %v784 = vpop.f32.mrb[0].mxu0
      %785 = vdwg.mxu0
      %v802 = vunpack.c.l.b16 %v665
      %v803 = vunpack.c.l.b16 %v666
      %v804 = vunpack.c.l.b16 %v667
      %v805 = vunpack.c.l.b16 %v668
      %v806 = vunpack.c.l.b16 %v669
      %v807 = vunpack.c.l.b16 %v670
      %v808 = vunpack.c.l.b16 %v671
      %v809 = vunpack.c.l.b16 %v672
      %v810 = vunpack.c.l.b16 %v673
      %v811 = vunpack.c.l.b16 %v674
      %v812 = vunpack.c.l.b16 %v675
      %v813 = vunpack.c.l.b16 %v676
      %v814 = vunpack.c.l.b16 %v677
      %v815 = vunpack.c.l.b16 %v678
      %v816 = vunpack.c.l.b16 %v679
      %v817 = vunpack.c.l.b16 %v680
      %v818 = vpack.c.b16 %v803, %v802
      %v819 = vpack.c.b16 %v805, %v804
      %v820 = vpack.c.b16 %v807, %v806
      %v821 = vpack.c.b16 %v809, %v808
      %v822 = vpack.c.b16 %v811, %v810
      %v823 = vpack.c.b16 %v813, %v812
      %v824 = vpack.c.b16 %v815, %v814
      %v825 = vpack.c.b16 %v817, %v816
      %834 = vmatprep.subr.bf16.mxu0 0
      %835 = vmatpush1.bf16.msra.mxu0 %v818
      %836 = vmatprep.subr.bf16.mxu0 0
      %837 = vmatpush1.bf16.msra.mxu0 %v819
      %838 = vmatprep.subr.bf16.mxu0 0
      %839 = vmatpush1.bf16.msra.mxu0 %v820
      %840 = vmatprep.subr.bf16.mxu0 0
      %841 = vmatpush1.bf16.msra.mxu0 %v821
      %842 = vmatprep.subr.bf16.mxu0 0
      %843 = vmatpush1.bf16.msra.mxu0 %v822
      %844 = vmatprep.subr.bf16.mxu0 0
      %845 = vmatpush1.bf16.msra.mxu0 %v823
      %846 = vmatprep.subr.bf16.mxu0 0
      %847 = vmatpush1.bf16.msra.mxu0 %v824
      %848 = vmatprep.subr.bf16.mxu0 0
      %849 = vmatpush1.bf16.msra.mxu0 %v825
      %850 = vmatprep.subr.bf16.mxu0 0
      %851 = vmatpush1.bf16.msra.mxu0 0
      %852 = vmatprep.subr.bf16.mxu0 0
      %853 = vmatpush1.bf16.msra.mxu0 0
      %854 = vmatprep.subr.bf16.mxu0 0
      %855 = vmatpush1.bf16.msra.mxu0 0
      %856 = vmatprep.subr.bf16.mxu0 0
      %857 = vmatpush1.bf16.msra.mxu0 0
      %858 = vmatprep.subr.bf16.mxu0 0
      %859 = vmatpush1.bf16.msra.mxu0 0
      %860 = vmatprep.subr.bf16.mxu0 0
      %861 = vmatpush1.bf16.msra.mxu0 0
      %862 = vmatprep.subr.bf16.mxu0 0
      %863 = vmatpush1.bf16.msra.mxu0 0
      %864 = vmatprep.subr.bf16.mxu0 0
      %865 = vmatpush1.bf16.msra.mxu0 0
      %866 = vmatprep.mubr.bf16.mxu0 0
      %867 = vmatmul.mubr.bf16.gmra.mrb[0].mxu0 %v657
      %v868 = vpop.f32.mrb[0].mxu0
      %v869 = vadd.f32 %v780, %v868
      %v870 = vpop.f32.mrb[0].mxu0
      %v871 = vpop.f32.mrb[0].mxu0
      %v872 = vadd.f32 %v783, %v871
      %v873 = vpop.f32.mrb[0].mxu0
      %874 = vdwg.mxu0
      %v875 = vld [vmem:[%s4] sm:$0x1]
      %v877 = vlaneseq
      %v878 = vshrl.u32 %v877, 7
      %v879 = vsub.s32 0, %v878
      %v880 = vrot.slane %v875, %v879
      %v882 = vadd.f32 %v869, %v880
      %v883 = vadd.f32 %v872, %v880
      %884 = vst [vmem:[#allocation9] sm:$0xff] %v882
      %885 = vst [vmem:[#allocation9 + $0x8] sm:$0xff] %v883
    $region41: #{tpu_custom_call.1} parent=1 // pred_fallthru
      _
    // Predicated region
    $region42: #{tpu_custom_call.1} parent=1 // pred_check
      _
    $region43: #{tpu_custom_call.1} parent=1 // pred_check_branch
      %887 = sbr.rel (0) target = $region45
    $region44: #{tpu_custom_call.1} parent=1 // pred_region
      %s889 = ssub.s32 256, 256
      %890 = vsyncadd [#allocation5], %s889
      %s891 = sshll.u32 [#allocation9], 4
      %s892 = int_to_ptr.vmem [resolvable:$true] %s891
      %897 = dma.vmem_to_hbm [thread:$0]  %s892, 256, %s5, [#allocation5], 128, 128, 8
    $region45: #{tpu_custom_call.1} parent=1 // pred_fallthru
      _
    // Predicated region
    $region46: #{tpu_custom_call.1} parent=1 // pred_check
      _
    $region47: #{tpu_custom_call.1} parent=1 // pred_check_branch
      %899 = sbr.rel (0) target = $region49
    $region48: #{tpu_custom_call.1} parent=1 // pred_region
      %900 = dma.done [#allocation5], 256
    $region49: #{tpu_custom_call.1} parent=1 // pred_fallthru
      _
    %901 = vsyncpa [#allocation4], 1
    %902 = vsyncpa [#allocation7], 1
    %903 = vsyncpa [#allocation5], 1

</llo_original>
